<compile_context>
chip_gen: v7x
topology: tpu7x:2x2x1
jax: 0.10.0
libtpu: 0.0.40
codegen_flags: <defaults>
</compile_context>

<pallas_src>
import jax
import jax.numpy as jnp
from jax.experimental import pallas as pl
from jax.experimental.pallas import tpu as pltpu

IN_FEATURES = 5205
OUT_FEATURES = 1


def linear_sigmoid_kernel(x_ref, w_ref, b_ref, o_ref):
    # x_ref: (TB, K) VMEM, w_ref: (1, K) VMEM (resident), b_ref: (1,) SMEM, o_ref: (TB, 1)
    # N=1 GEMV on the VPU (multiply) + XLU (lane reduce); f32 accumulation.
    acc = jnp.sum(x_ref[...] * w_ref[...], axis=-1, keepdims=True)
    # TODO(synk): dropout(p=0.5) is identity at inference; training-mode masking
    # would use pltpu.prng_seed/prng_random_bits with 1/(1-p) scaling.
    o_ref[...] = jax.nn.sigmoid(acc + b_ref[0])


def mymodel_forward(x, w, b, *, tb=512):
    """x: (B, 5205) f32, w: (1, 5205) f32 (PyTorch layout), b: (1,) f32 -> (B, 1) f32.

    Note: for tiny B (e.g. the demo below) a plain fused jnp expression would be as
    fast or faster; this kernel pays off at large B where it runs at HBM roofline.
    """
    B, K = x.shape
    tb = min(tb, B)                 # full-extent batch block when B is small
    grid = (pl.cdiv(B, tb),)        # partial trailing block is masked on write

    return pl.pallas_call(
        linear_sigmoid_kernel,
        out_shape=jax.ShapeDtypeStruct((B, OUT_FEATURES), jnp.float32),
        grid=grid,
        in_specs=[
            # x: tiled over batch, full (unpadded) K on the lane axis.
            pl.BlockSpec((tb, K), lambda i: (i, 0)),
            # w: constant index_map -> stays resident in VMEM across the grid.
            pl.BlockSpec((1, K), lambda i: (0, 0)),
            # b: scalar bias in SMEM, untiled.
            pl.BlockSpec(memory_space=pltpu.MemorySpace.SMEM),
        ],
        out_specs=pl.BlockSpec((tb, OUT_FEATURES), lambda i: (i, 0)),
        compiler_params=pltpu.CompilerParams(
            dimension_semantics=("parallel",),   # let v7x's two TCs split the batch
        ),
    )(x, w, b)


if __name__ == "__main__":
    key = jax.random.PRNGKey(0)
    kx, kw, kb = jax.random.split(key, 3)

    B = 8
    x = jax.random.normal(kx, (B, IN_FEATURES), dtype=jnp.float32)

    # Deterministic parameter init (matches nn.Linear shapes: W (1, 5205), b (1,))
    bound = 1.0 / (IN_FEATURES ** 0.5)
    w = jax.random.uniform(kw, (OUT_FEATURES, IN_FEATURES),
                           minval=-bound, maxval=bound, dtype=jnp.float32)
    b = jax.random.uniform(kb, (OUT_FEATURES,),
                           minval=-bound, maxval=bound, dtype=jnp.float32)

    out = mymodel_forward(x, w, b)
    out = jax.block_until_ready(out)

    # Sanity check against plain-JAX reference (eval-mode dropout = identity)
    ref = jax.nn.sigmoid(x @ w.T + b)
    assert out.shape == (B, OUT_FEATURES)
    assert jnp.max(jnp.abs(out - ref)) < 1e-5

    print("KERNEL_OK")
</pallas_src>

<mosaic_0001>
module attributes {stable_mosaic.version = 11 : i64} {
  func.func @linear_sigmoid_kernel(%arg0: i32, %arg1: memref<8x5205xf32, #tpu.memory_space<vmem>>, %arg2: memref<1x5205xf32, #tpu.memory_space<vmem>>, %arg3: memref<1xf32, #tpu.memory_space<smem>>, %arg4: memref<8x1xf32, #tpu.memory_space<vmem>>) attributes {dimension_semantics = [#tpu.dimension_semantics<parallel>], iteration_bounds = array<i64: 1>, scalar_prefetch = 0 : i64, scratch_operands = 0 : i64, tpu.core_type = #tpu.core_type<tc>, window_params = [{transform_indices = @transform_0, window_bounds = array<i64: 8, 5205>}, {pipeline_mode = #tpu.pipeline_mode<synchronous>, transform_indices = @transform_1, window_bounds = array<i64: 1, 5205>}, {transform_indices = @transform_2, window_bounds = array<i64: 1>}, {transform_indices = @transform_3, window_bounds = array<i64: 8, 1>}]} {
    %c0 = arith.constant 0 : index
    %c0_0 = arith.constant 0 : index
    %0 = vector.load %arg1[%c0, %c0_0] : memref<8x5205xf32, #tpu.memory_space<vmem>>, vector<8x5205xf32>
    %c0_1 = arith.constant 0 : index
    %c0_2 = arith.constant 0 : index
    %1 = vector.load %arg2[%c0_1, %c0_2] : memref<1x5205xf32, #tpu.memory_space<vmem>>, vector<1x5205xf32>
    %2 = vector.broadcast %1 : vector<1x5205xf32> to vector<8x5205xf32>
    %3 = arith.mulf %0, %2 : vector<8x5205xf32>
    %cst = arith.constant dense<0.000000e+00> : vector<8xf32>
    %4 = vector.multi_reduction <add>, %3, %cst [1] : vector<8x5205xf32> to vector<8xf32>
    %5 = vector.shape_cast %4 : vector<8xf32> to vector<8x1xf32>
    %c0_3 = arith.constant 0 : index
    %6 = memref.load %arg3[%c0_3] : memref<1xf32, #tpu.memory_space<smem>>
    %7 = vector.broadcast %6 : f32 to vector<8x1xf32>
    %8 = arith.addf %5, %7 : vector<8x1xf32>
    %9 = arith.negf %8 : vector<8x1xf32>
    %10 = math.exp %9 : vector<8x1xf32>
    %cst_4 = arith.constant 1.000000e+00 : f32
    %11 = vector.broadcast %cst_4 : f32 to vector<8x1xf32>
    %12 = arith.addf %11, %10 : vector<8x1xf32>
    %13 = arith.divf %11, %12 : vector<8x1xf32>
    %c0_5 = arith.constant 0 : index
    %c0_6 = arith.constant 0 : index
    %14 = vector.load %arg4[%c0_5, %c0_6] : memref<8x1xf32, #tpu.memory_space<vmem>>, vector<8x1xf32>
    tpu.vector_store %arg4[%c0_5, %c0_6], %13 {strides = array<i32>} : memref<8x1xf32, #tpu.memory_space<vmem>>, vector<8x1xf32>,
    return
  }
  func.func @transform_0(%arg0: i32) -> (i32, i32) {
    %c0_i32 = arith.constant 0 : i32
    %c0_i32_0 = arith.constant 0 : i32
    return %arg0, %c0_i32 : i32, i32
  }
  func.func @transform_1(%arg0: i32) -> (i32, i32) {
    %c0_i32 = arith.constant 0 : i32
    %c0_i32_0 = arith.constant 0 : i32
    %c0_i32_1 = arith.constant 0 : i32
    return %c0_i32, %c0_i32_0 : i32, i32
  }
  func.func @transform_2(%arg0: i32) -> i32 {
    %c0_i32 = arith.constant 0 : i32
    %c0_i32_0 = arith.constant 0 : i32
    return %c0_i32 : i32
  }
  func.func @transform_3(%arg0: i32) -> (i32, i32) {
    %c0_i32 = arith.constant 0 : i32
    %c0_i32_0 = arith.constant 0 : i32
    return %arg0, %c0_i32 : i32, i32
  }
}

</mosaic_0001>

<llo_original>
// kernel: tpu_custom_call.1
$region0: #{tpu_custom_call.1}
  #allocation0 [shape = 'u32[]', space=smem, size = 0x4, offset = 0x4, fixed_abs, tag = 'smem constant byte address 0x4 - core index']
  #allocation1 [shape = 'u32[144,128]{1,0:T(1,128)}', space=vmem, size = 0x12000, scoped, tag = 'internal scratch']
  #allocation2 [shape = 'f32[1]{0:T(128)S(6)}', space=smem, size = 0x200, scoped, tag = 'scoped memory for tpu_custom_call.1']
  %s0 = inlined_call_operand.hbm [shape: f32[8,5205], index: 0, kind: input, shape index: {}]
  %s1 = inlined_call_operand.hbm [shape: f32[1,5205], index: 1, kind: input, shape index: {}]
  %s2 = inlined_call_operand.<no memory space> [shape: f32[1], index: 2, kind: input, shape index: {}]
  %s3 = inlined_call_operand.vmem [shape: f32[8,1], index: 3, kind: output, shape index: {}]
  %s4 = sld [smem:[#allocation0]]
  $region30: #{tpu_custom_call.1} parent=0
    _
  %s6 = ssub.s32 1, %s4
  %s7 = scalar_select 0, %s6, %s4
  %8 = sst [smem:[#allocation2]] %s2
  $region1: #{tpu_custom_call.1} parent=0
    #allocation3 [shape = 'u8[167936]{0}', space=vmem, size = 0x29000, scoped, tag = 'input window, operand 0, single buffered']
    #allocation4 [shape = 's32[1]{0}', space=sflag, size = 0x4, scoped, tag = 'scoped memory for tpu_custom_call.1']
    #allocation5 [shape = 'u8[20992]{0}', space=vmem, size = 0x5400, scoped, tag = 'input window, operand 1, single buffered']
    #allocation6 [shape = 's32[1]{0}', space=sflag, size = 0x4, scoped, tag = 'scoped memory for tpu_custom_call.1']
    %9 = vsyncpa [#allocation4], 0
    %10 = vsyncpa [#allocation6], 0
    // Predicated region
    $region2: #{tpu_custom_call.1} parent=1 // pred_check
      _
    $region3: #{tpu_custom_call.1} parent=1 // pred_check_branch
      %12 = sbr.rel (0) target = $region5
    $region4: #{tpu_custom_call.1} parent=1 // pred_region
      %s14 = ssub.s32 5248, 5248
      %15 = vsyncadd [#allocation4], %s14
      %s17 = sshll.u32 [#allocation3], 4
      %s18 = int_to_ptr.vmem [resolvable:$true] %s17
      %20 = dma.hbm_to_vmem [thread:$0]  %s0, 5248, %s18, [#allocation4]
    $region5: #{tpu_custom_call.1} parent=1 // pred_fallthru
      _
    // Predicated region
    $region6: #{tpu_custom_call.1} parent=1 // pred_check
      _
    $region7: #{tpu_custom_call.1} parent=1 // pred_check_branch
      %22 = sbr.rel (0) target = $region9
    $region8: #{tpu_custom_call.1} parent=1 // pred_region
      %s24 = ssub.s32 656, 656
      %25 = vsyncadd [#allocation6], %s24
      %s27 = sshll.u32 [#allocation5], 4
      %s28 = int_to_ptr.vmem [resolvable:$true] %s27
      %30 = dma.hbm_to_vmem [thread:$0]  %s1, 656, %s28, [#allocation6]
    $region9: #{tpu_custom_call.1} parent=1 // pred_fallthru
      _
    // Predicated region
    $region10: #{tpu_custom_call.1} parent=1 // pred_check
      _
    $region11: #{tpu_custom_call.1} parent=1 // pred_check_branch
      %32 = sbr.rel (0) target = $region13
    $region12: #{tpu_custom_call.1} parent=1 // pred_region
      _
    $region13: #{tpu_custom_call.1} parent=1 // pred_fallthru
      _
    // Predicated region
    $region14: #{tpu_custom_call.1} parent=1 // pred_check
      _
    $region15: #{tpu_custom_call.1} parent=1 // pred_check_branch
      %34 = sbr.rel (0) target = $region17
    $region16: #{tpu_custom_call.1} parent=1 // pred_region
      %35 = dma.done [#allocation4], 5248
    $region17: #{tpu_custom_call.1} parent=1 // pred_fallthru
      _
    // Predicated region
    $region18: #{tpu_custom_call.1} parent=1 // pred_check
      _
    $region19: #{tpu_custom_call.1} parent=1 // pred_check_branch
      %37 = sbr.rel (0) target = $region21
    $region20: #{tpu_custom_call.1} parent=1 // pred_region
      %38 = dma.done [#allocation6], 656
    $region21: #{tpu_custom_call.1} parent=1 // pred_fallthru
      _
    %v39 = vld [vmem:[#allocation3] sm:$0xff]
    %v40 = vld [vmem:[#allocation3 + $0x8] sm:$0xff]
    %v41 = vld [vmem:[#allocation3 + $0x10] sm:$0xff]
    %v42 = vld [vmem:[#allocation3 + $0x18] sm:$0xff]
    %v43 = vld [vmem:[#allocation3 + $0x20] sm:$0xff]
    %v44 = vld [vmem:[#allocation3 + $0x28] sm:$0xff]
    %v45 = vld [vmem:[#allocation3 + $0x30] sm:$0xff]
    %v46 = vld [vmem:[#allocation3 + $0x38] sm:$0xff]
    %v47 = vld [vmem:[#allocation3 + $0x40] sm:$0xff]
    %v48 = vld [vmem:[#allocation3 + $0x48] sm:$0xff]
    %v49 = vld [vmem:[#allocation3 + $0x50] sm:$0xff]
    %v50 = vld [vmem:[#allocation3 + $0x58] sm:$0xff]
    %v51 = vld [vmem:[#allocation3 + $0x60] sm:$0xff]
    %v52 = vld [vmem:[#allocation3 + $0x68] sm:$0xff]
    %v53 = vld [vmem:[#allocation3 + $0x70] sm:$0xff]
    %v54 = vld [vmem:[#allocation3 + $0x78] sm:$0xff]
    %v55 = vld [vmem:[#allocation3 + $0x80] sm:$0xff]
    %v56 = vld [vmem:[#allocation3 + $0x88] sm:$0xff]
    %v57 = vld [vmem:[#allocation3 + $0x90] sm:$0xff]
    %v58 = vld [vmem:[#allocation3 + $0x98] sm:$0xff]
    %v59 = vld [vmem:[#allocation3 + $0xa0] sm:$0xff]
    %v60 = vld [vmem:[#allocation3 + $0xa8] sm:$0xff]
    %v61 = vld [vmem:[#allocation3 + $0xb0] sm:$0xff]
    %v62 = vld [vmem:[#allocation3 + $0xb8] sm:$0xff]
    %v63 = vld [vmem:[#allocation3 + $0xc0] sm:$0xff]
    %v64 = vld [vmem:[#allocation3 + $0xc8] sm:$0xff]
    %v65 = vld [vmem:[#allocation3 + $0xd0] sm:$0xff]
    %v66 = vld [vmem:[#allocation3 + $0xd8] sm:$0xff]
    %v67 = vld [vmem:[#allocation3 + $0xe0] sm:$0xff]
    %v68 = vld [vmem:[#allocation3 + $0xe8] sm:$0xff]
    %v69 = vld [vmem:[#allocation3 + $0xf0] sm:$0xff]
    %v70 = vld [vmem:[#allocation3 + $0xf8] sm:$0xff]
    %v71 = vld [vmem:[#allocation3 + $0x100] sm:$0xff]
    %v72 = vld [vmem:[#allocation3 + $0x108] sm:$0xff]
    %v73 = vld [vmem:[#allocation3 + $0x110] sm:$0xff]
    %v74 = vld [vmem:[#allocation3 + $0x118] sm:$0xff]
    %v75 = vld [vmem:[#allocation3 + $0x120] sm:$0xff]
    %v76 = vld [vmem:[#allocation3 + $0x128] sm:$0xff]
    %v77 = vld [vmem:[#allocation3 + $0x130] sm:$0xff]
    %v78 = vld [vmem:[#allocation3 + $0x138] sm:$0xff]
    %v79 = vld [vmem:[#allocation3 + $0x140] sm:$0xff]
    %v80 = vld [vmem:[#allocation5] sm:$0xff]
    %v81 = vld [vmem:[#allocation5 + $0x8] sm:$0xff]
    %v82 = vld [vmem:[#allocation5 + $0x10] sm:$0xff]
    %v83 = vld [vmem:[#allocation5 + $0x18] sm:$0xff]
    %v84 = vld [vmem:[#allocation5 + $0x20] sm:$0xff]
    %v85 = vld [vmem:[#allocation5 + $0x28] sm:$0x1]
    %v92 = vlaneseq
    %v93 = vshrl.u32 %v92, 7
    %v94 = vsub.s32 0, %v93
    %v95 = vrot.slane %v80, %v94
    %v96 = vlaneseq
    %v97 = vshrl.u32 %v96, 7
    %v98 = vsub.s32 1, %v97
    %v99 = vrot.slane %v80, %v98
    %v100 = vlaneseq
    %v101 = vshrl.u32 %v100, 7
    %v102 = vsub.s32 2, %v101
    %v103 = vrot.slane %v80, %v102
    %v104 = vlaneseq
    %v105 = vshrl.u32 %v104, 7
    %v106 = vsub.s32 3, %v105
    %v107 = vrot.slane %v80, %v106
    %v108 = vlaneseq
    %v109 = vshrl.u32 %v108, 7
    %v110 = vsub.s32 4, %v109
    %v111 = vrot.slane %v80, %v110
    %v112 = vlaneseq
    %v113 = vshrl.u32 %v112, 7
    %v114 = vsub.s32 5, %v113
    %v115 = vrot.slane %v80, %v114
    %v116 = vlaneseq
    %v117 = vshrl.u32 %v116, 7
    %v118 = vsub.s32 6, %v117
    %v119 = vrot.slane %v80, %v118
    %v120 = vlaneseq
    %v121 = vshrl.u32 %v120, 7
    %v122 = vsub.s32 7, %v121
    %v123 = vrot.slane %v80, %v122
    %v124 = vlaneseq
    %v125 = vshrl.u32 %v124, 7
    %v126 = vsub.s32 0, %v125
    %v127 = vrot.slane %v81, %v126
    %v128 = vlaneseq
    %v129 = vshrl.u32 %v128, 7
    %v130 = vsub.s32 1, %v129
    %v131 = vrot.slane %v81, %v130
    %v132 = vlaneseq
    %v133 = vshrl.u32 %v132, 7
    %v134 = vsub.s32 2, %v133
    %v135 = vrot.slane %v81, %v134
    %v136 = vlaneseq
    %v137 = vshrl.u32 %v136, 7
    %v138 = vsub.s32 3, %v137
    %v139 = vrot.slane %v81, %v138
    %v140 = vlaneseq
    %v141 = vshrl.u32 %v140, 7
    %v142 = vsub.s32 4, %v141
    %v143 = vrot.slane %v81, %v142
    %v144 = vlaneseq
    %v145 = vshrl.u32 %v144, 7
    %v146 = vsub.s32 5, %v145
    %v147 = vrot.slane %v81, %v146
    %v148 = vlaneseq
    %v149 = vshrl.u32 %v148, 7
    %v150 = vsub.s32 6, %v149
    %v151 = vrot.slane %v81, %v150
    %v152 = vlaneseq
    %v153 = vshrl.u32 %v152, 7
    %v154 = vsub.s32 7, %v153
    %v155 = vrot.slane %v81, %v154
    %v156 = vlaneseq
    %v157 = vshrl.u32 %v156, 7
    %v158 = vsub.s32 0, %v157
    %v159 = vrot.slane %v82, %v158
    %v160 = vlaneseq
    %v161 = vshrl.u32 %v160, 7
    %v162 = vsub.s32 1, %v161
    %v163 = vrot.slane %v82, %v162
    %v164 = vlaneseq
    %v165 = vshrl.u32 %v164, 7
    %v166 = vsub.s32 2, %v165
    %v167 = vrot.slane %v82, %v166
    %v168 = vlaneseq
    %v169 = vshrl.u32 %v168, 7
    %v170 = vsub.s32 3, %v169
    %v171 = vrot.slane %v82, %v170
    %v172 = vlaneseq
    %v173 = vshrl.u32 %v172, 7
    %v174 = vsub.s32 4, %v173
    %v175 = vrot.slane %v82, %v174
    %v176 = vlaneseq
    %v177 = vshrl.u32 %v176, 7
    %v178 = vsub.s32 5, %v177
    %v179 = vrot.slane %v82, %v178
    %v180 = vlaneseq
    %v181 = vshrl.u32 %v180, 7
    %v182 = vsub.s32 6, %v181
    %v183 = vrot.slane %v82, %v182
    %v184 = vlaneseq
    %v185 = vshrl.u32 %v184, 7
    %v186 = vsub.s32 7, %v185
    %v187 = vrot.slane %v82, %v186
    %v188 = vlaneseq
    %v189 = vshrl.u32 %v188, 7
    %v190 = vsub.s32 0, %v189
    %v191 = vrot.slane %v83, %v190
    %v192 = vlaneseq
    %v193 = vshrl.u32 %v192, 7
    %v194 = vsub.s32 1, %v193
    %v195 = vrot.slane %v83, %v194
    %v196 = vlaneseq
    %v197 = vshrl.u32 %v196, 7
    %v198 = vsub.s32 2, %v197
    %v199 = vrot.slane %v83, %v198
    %v200 = vlaneseq
    %v201 = vshrl.u32 %v200, 7
    %v202 = vsub.s32 3, %v201
    %v203 = vrot.slane %v83, %v202
    %v204 = vlaneseq
    %v205 = vshrl.u32 %v204, 7
    %v206 = vsub.s32 4, %v205
    %v207 = vrot.slane %v83, %v206
    %v208 = vlaneseq
    %v209 = vshrl.u32 %v208, 7
    %v210 = vsub.s32 5, %v209
    %v211 = vrot.slane %v83, %v210
    %v212 = vlaneseq
    %v213 = vshrl.u32 %v212, 7
    %v214 = vsub.s32 6, %v213
    %v215 = vrot.slane %v83, %v214
    %v216 = vlaneseq
    %v217 = vshrl.u32 %v216, 7
    %v218 = vsub.s32 7, %v217
    %v219 = vrot.slane %v83, %v218
    %v220 = vlaneseq
    %v221 = vshrl.u32 %v220, 7
    %v222 = vsub.s32 0, %v221
    %v223 = vrot.slane %v84, %v222
    %v224 = vlaneseq
    %v225 = vshrl.u32 %v224, 7
    %v226 = vsub.s32 1, %v225
    %v227 = vrot.slane %v84, %v226
    %v228 = vlaneseq
    %v229 = vshrl.u32 %v228, 7
    %v230 = vsub.s32 2, %v229
    %v231 = vrot.slane %v84, %v230
    %v232 = vlaneseq
    %v233 = vshrl.u32 %v232, 7
    %v234 = vsub.s32 3, %v233
    %v235 = vrot.slane %v84, %v234
    %v236 = vlaneseq
    %v237 = vshrl.u32 %v236, 7
    %v238 = vsub.s32 4, %v237
    %v239 = vrot.slane %v84, %v238
    %v240 = vlaneseq
    %v241 = vshrl.u32 %v240, 7
    %v242 = vsub.s32 5, %v241
    %v243 = vrot.slane %v84, %v242
    %v244 = vlaneseq
    %v245 = vshrl.u32 %v244, 7
    %v246 = vsub.s32 6, %v245
    %v247 = vrot.slane %v84, %v246
    %v248 = vlaneseq
    %v249 = vshrl.u32 %v248, 7
    %v250 = vsub.s32 7, %v249
    %v251 = vrot.slane %v84, %v250
    %v252 = vlaneseq
    %v253 = vshrl.u32 %v252, 7
    %v254 = vsub.s32 0, %v253
    %v255 = vrot.slane %v85, %v254
    %v297 = vmul.f32 %v39, %v95
    %v298 = vmul.f32 %v40, %v99
    %v299 = vmul.f32 %v41, %v103
    %v300 = vmul.f32 %v42, %v107
    %v301 = vmul.f32 %v43, %v111
    %v302 = vmul.f32 %v44, %v115
    %v303 = vmul.f32 %v45, %v119
    %v304 = vmul.f32 %v46, %v123
    %v305 = vmul.f32 %v47, %v127
    %v306 = vmul.f32 %v48, %v131
    %v307 = vmul.f32 %v49, %v135
    %v308 = vmul.f32 %v50, %v139
    %v309 = vmul.f32 %v51, %v143
    %v310 = vmul.f32 %v52, %v147
    %v311 = vmul.f32 %v53, %v151
    %v312 = vmul.f32 %v54, %v155
    %v313 = vmul.f32 %v55, %v159
    %v314 = vmul.f32 %v56, %v163
    %v315 = vmul.f32 %v57, %v167
    %v316 = vmul.f32 %v58, %v171
    %v317 = vmul.f32 %v59, %v175
    %v318 = vmul.f32 %v60, %v179
    %v319 = vmul.f32 %v61, %v183
    %v320 = vmul.f32 %v62, %v187
    %v321 = vmul.f32 %v63, %v191
    %v322 = vmul.f32 %v64, %v195
    %v323 = vmul.f32 %v65, %v199
    %v324 = vmul.f32 %v66, %v203
    %v325 = vmul.f32 %v67, %v207
    %v326 = vmul.f32 %v68, %v211
    %v327 = vmul.f32 %v69, %v215
    %v328 = vmul.f32 %v70, %v219
    %v329 = vmul.f32 %v71, %v223
    %v330 = vmul.f32 %v72, %v227
    %v331 = vmul.f32 %v73, %v231
    %v332 = vmul.f32 %v74, %v235
    %v333 = vmul.f32 %v75, %v239
    %v334 = vmul.f32 %v76, %v243
    %v335 = vmul.f32 %v77, %v247
    %v336 = vmul.f32 %v78, %v251
    %v337 = vmul.f32 %v79, %v255
    %v338 = vadd.f32 %v297, %v298
    %v339 = vadd.f32 %v338, %v299
    %v340 = vadd.f32 %v339, %v300
    %v341 = vadd.f32 %v340, %v301
    %v342 = vadd.f32 %v341, %v302
    %v343 = vadd.f32 %v342, %v303
    %v344 = vadd.f32 %v343, %v304
    %v345 = vadd.f32 %v344, %v305
    %v346 = vadd.f32 %v345, %v306
    %v347 = vadd.f32 %v346, %v307
    %v348 = vadd.f32 %v347, %v308
    %v349 = vadd.f32 %v348, %v309
    %v350 = vadd.f32 %v349, %v310
    %v351 = vadd.f32 %v350, %v311
    %v352 = vadd.f32 %v351, %v312
    %v353 = vadd.f32 %v352, %v313
    %v354 = vadd.f32 %v353, %v314
    %v355 = vadd.f32 %v354, %v315
    %v356 = vadd.f32 %v355, %v316
    %v357 = vadd.f32 %v356, %v317
    %v358 = vadd.f32 %v357, %v318
    %v359 = vadd.f32 %v358, %v319
    %v360 = vadd.f32 %v359, %v320
    %v361 = vadd.f32 %v360, %v321
    %v362 = vadd.f32 %v361, %v322
    %v363 = vadd.f32 %v362, %v323
    %v364 = vadd.f32 %v363, %v324
    %v365 = vadd.f32 %v364, %v325
    %v366 = vadd.f32 %v365, %v326
    %v367 = vadd.f32 %v366, %v327
    %v368 = vadd.f32 %v367, %v328
    %v369 = vadd.f32 %v368, %v329
    %v370 = vadd.f32 %v369, %v330
    %v371 = vadd.f32 %v370, %v331
    %v372 = vadd.f32 %v371, %v332
    %v373 = vadd.f32 %v372, %v333
    %v374 = vadd.f32 %v373, %v334
    %v375 = vadd.f32 %v374, %v335
    %v376 = vadd.f32 %v375, %v336
    %vm377 = vcmask 695296
    %v378 = vsel %vm377, %v337, 0.0
    %v379 = vadd.f32 %v376, %v378
    %380 = vadd.xlane.f32.xlu0 %v379
    %v381 = vpop.xlane.xlu0 %380
    %s382 = sld [smem:[#allocation2]]
    %v383 = vstv %s382
    %v384 = vadd.f32 %v381, %v383
    %v385 = vxor.u32 %v384, 2147483648
    %v386 = vmul.f32 %v385, 1.442695
    %v387 = vpow.pop %v386
    %v388 = vadd.f32 %v387, 1.0
    %v389 = vrcp.pop %v388
    %v390 = vmul.f32 1.0, %v389
    %vm391 = vcmask 7168
    %392 = vst.msk [vmem:[%s3] sm:$0xff] %vm391, %v390
    // Predicated region
    $region22: #{tpu_custom_call.1} parent=1 // pred_check
      _
    $region23: #{tpu_custom_call.1} parent=1 // pred_check_branch
      %394 = sbr.rel (0) target = $region25
    $region24: #{tpu_custom_call.1} parent=1 // pred_region
      _
    $region25: #{tpu_custom_call.1} parent=1 // pred_fallthru
      _
    // Predicated region
    $region26: #{tpu_custom_call.1} parent=1 // pred_check
      _
    $region27: #{tpu_custom_call.1} parent=1 // pred_check_branch
      %396 = sbr.rel (0) target = $region29
    $region28: #{tpu_custom_call.1} parent=1 // pred_region
      _
    $region29: #{tpu_custom_call.1} parent=1 // pred_fallthru
      _
    %397 = vsyncpa [#allocation4], 1
    %398 = vsyncpa [#allocation6], 1

</llo_original>
